<compile_context>
chip_gen: v6e
topology: v6e:2x2x1
jax: 0.10.0
libtpu: 0.0.40
codegen_flags: <defaults>
</compile_context>

<pallas_src>
import functools

import numpy as np

import jax
import jax.numpy as jnp
from jax.experimental import pallas as pl
from jax.experimental.pallas import tpu as pltpu


_VMEM_TILE_BUDGET_BYTES = 24 * 1024 * 1024  # conservative across v5e/v6e/v7x


def _round_up(n, m):
    return ((n + m - 1) // m) * m


def _row_align(dtype):
    """Sublane alignment for a block second-minor dim of this dtype."""
    return max(8, 32 // np.dtype(dtype).itemsize)   # f32:8, bf16:16, int8:32


def _estimate_tile_vmem_bytes(rows, win_w, n_live_windows, acc_w,
                              in_itemsize, op_itemsize, out_itemsize, w_rows):
    """Rough per-tile VMEM high-water mark (VMEM tiles pad to (8,128))."""
    lanes = lambda n: _round_up(max(n, 1), 128)
    subl = lambda n: _round_up(max(n, 1), 8)
    x_in = 2 * subl(rows) * lanes(win_w) * in_itemsize             # dbl-buffered input block
    wins = n_live_windows * subl(rows) * lanes(win_w) * max(op_itemsize, in_itemsize)
    acc = 2 * subl(rows) * lanes(acc_w) * 4                        # f32 acc + epilogue temps
    out = 2 * subl(rows) * lanes(acc_w // 2) * out_itemsize        # dbl-buffered output block
    wgt = 2 * subl(w_rows) * lanes(acc_w) * op_itemsize            # fused weight
    return x_in + wins + acc + out + wgt


def _pick_batches_per_tile(batch, packed_t, tile_bytes_fn, row_align, budget):
    """Largest whole-batch tile that fits the VMEM budget and is sublane
    aligned, preferring >= 2 grid steps (v7x has two TensorCores)."""
    divisors = [d for d in range(1, batch + 1) if batch % d == 0]
    aligned = lambda d: (d * packed_t) % row_align == 0 or d == batch
    fitting = [d for d in divisors if aligned(d) and tile_bytes_fn(d) <= budget]
    if fitting:
        multi = [d for d in fitting if batch // d >= 2]
        return max(multi) if multi else max(fitting)
    aligned_divs = [d for d in divisors if aligned(d)]
    return min(aligned_divs) if aligned_divs else batch


def _conv_glu_kernel(x_ref, w_ref, b_ref, o_ref, *, d_vals, packed_t, win_w,
                     out_half, fuse_taps, op_dtype):
    """ConvGLU over one tile of packed (batch*time) rows.

    x_ref : (rows, win_w)            g time steps packed per 128-ish lane row
    w_ref : (len(d_vals)*win_w, 2*out_half)  fused/packed conv weight
    b_ref : (1, 2*out_half)          packed bias, [values | gates] (f32)
    o_ref : (rows, out_half)         packed GLU output
    """
    rows = x_ref.shape[0]
    x = x_ref[...]

    # In-batch packed-time index of each row (tiles hold whole batch elements).
    jp = jax.lax.broadcasted_iota(jnp.int32, (rows, 1), 0) % packed_t

    def tap(d):
        """Rows shifted by d packed steps; rows whose window crosses a
        sequence boundary (incl. the roll wrap-around) are zeroed -- this
        reproduces the Conv1d left/right zero padding exactly."""
        if d == 0:
            return x
        win = pltpu.roll(x, shift=(-d) % rows, axis=0)       # XLU slot, ~free
        valid = jnp.logical_and(jp + d >= 0, jp + d < packed_t)
        return jnp.where(valid, win, jnp.zeros_like(win))

    if fuse_taps:
        # Fused im2col: one MXU matmul of depth len(d_vals) * win_w.
        if len(d_vals) == 1:
            x_col = tap(d_vals[0])
        else:
            x_col = jnp.concatenate([tap(d) for d in d_vals], axis=-1)
        acc = jnp.dot(x_col.astype(op_dtype), w_ref[...],
                      preferred_element_type=jnp.float32)
    else:
        # Wide channels: one accumulated matmul per tap, no K-x im2col buffer.
        acc = None
        for i, d in enumerate(d_vals):
            part = jnp.dot(tap(d).astype(op_dtype),
                           w_ref[i * win_w:(i + 1) * win_w, :],
                           preferred_element_type=jnp.float32)
            acc = part if acc is None else acc + part

    acc = acc + b_ref[...]

    # GLU epilogue in f32: weight columns are packed [values | gates], so both
    # halves are aligned lane slices -- no de-interleave needed.
    value = acc[:, :out_half]
    gate = acc[:, out_half:]
    o_ref[...] = (value * jax.nn.sigmoid(gate)).astype(o_ref.dtype)


def conv_glu(x, w, b, *, kernel_size, left_padding, right_padding,
             compute_dtype=None):
    """ConvGLU forward.

    x : (B, T, C_in)
    w : (K, C_in, 2*C_out)   conv weight, [value | gate] fused on the last dim
                             (PyTorch Conv1d weight (2*C_out, C_in, K) maps to
                              this via transpose(2, 1, 0))
    b : (2*C_out,)           conv bias,   [value | gate] fused
    returns (B, T_out, C_out), T_out = T + left + right - K + 1 (== T here)
    """
    batch, time_steps, c_in = x.shape
    k_sz, wc_in, two_c_out = w.shape
    assert k_sz == kernel_size and wc_in == c_in and two_c_out % 2 == 0
    c_out = two_c_out // 2
    t_out = time_steps + left_padding + right_padding - kernel_size + 1
    # For this module (encode and decode alike) left+right == K-1, so T_out==T
    # and the packed-row formulation below is exact.
    assert t_out == time_steps, "left+right padding must equal kernel_size-1"

    out_dtype = x.dtype
    op_dtype = np.dtype(compute_dtype) if compute_dtype is not None else np.dtype(x.dtype)

    # ---- time-step packing factor g: g consecutive time steps -> one row.
    g = 1
    if c_in <= 128 and 128 % c_in == 0:
        g = 128 // c_in                     # power of two
        while g > 1 and time_steps % g != 0:
            g //= 2
    packed_t = time_steps // g              # packed rows per batch element
    win_w = g * c_in                        # lanes per tap window
    out_half = g * c_out                    # lanes of the packed GLU output
    acc_w = 2 * out_half                    # fused value|gate matmul width

    shifts = [k - left_padding for k in range(kernel_size)]
    d_vals = tuple(sorted({(p + s) // g for p in range(g) for s in shifts}))
    n_win = len(d_vals)
    # Keep fused im2col while the per-window depth underfills the MXU;
    # otherwise accumulate per tap and avoid the n_win-x im2col buffer.
    fuse_taps = n_win == 1 or win_w < 256

    # ---- host-side weight/bias packing (tiny, done once per call).
    # Row layout:    (window d, in-row slot q, c_in)
    # Column layout: (value/gate, out-row slot p, c_out)  -> GLU halves are
    # contiguous, so the kernel epilogue needs no lane de-interleave.
    w_val, w_gate = w[:, :, :c_out], w[:, :, c_out:]
    wp = jnp.zeros((n_win, g, c_in, 2, g, c_out), w.dtype)
    d_index = {d: i for i, d in enumerate(d_vals)}
    for k, s in enumerate(shifts):
        for p in range(g):
            d, q = (p + s) // g, (p + s) % g
            wp = wp.at[d_index[d], q, :, 0, p, :].set(w_val[k])
            wp = wp.at[d_index[d], q, :, 1, p, :].set(w_gate[k])
    w2 = wp.reshape(n_win * win_w, acc_w).astype(op_dtype)
    b2 = jnp.concatenate([jnp.tile(b[:c_out], g), jnp.tile(b[c_out:], g)]
                         ).reshape(1, acc_w).astype(jnp.float32)

    # ---- lane-dense views of x / out: pure row-major reshapes, no HBM pass.
    # NOTE: no astype(op_dtype) here -- the cast happens inside the kernel.
    packed_rows = batch * packed_t
    x2 = x.reshape(packed_rows, win_w)

    # ---- tile selection against the real per-tile VMEM footprint.
    row_align = max(_row_align(x2.dtype), _row_align(out_dtype))

    def tile_bytes(b_blk):
        return _estimate_tile_vmem_bytes(
            b_blk * packed_t, win_w, n_win if fuse_taps else 2, acc_w,
            np.dtype(x2.dtype).itemsize, op_dtype.itemsize,
            np.dtype(out_dtype).itemsize, n_win * win_w)

    b_blk = _pick_batches_per_tile(batch, packed_t, tile_bytes, row_align,
                                   _VMEM_TILE_BUDGET_BYTES)
    rows_blk = b_blk * packed_t
    grid = (batch // b_blk,)
    vmem_limit = int(max(32 * 1024 * 1024,
                         min(int(1.5 * tile_bytes(b_blk)), 100 * 1024 * 1024)))

    kernel = functools.partial(
        _conv_glu_kernel, d_vals=d_vals, packed_t=packed_t, win_w=win_w,
        out_half=out_half, fuse_taps=fuse_taps, op_dtype=op_dtype)

    out2 = pl.pallas_call(
        kernel,
        out_shape=jax.ShapeDtypeStruct((packed_rows, out_half), out_dtype),
        grid_spec=pltpu.PrefetchScalarGridSpec(
            num_scalar_prefetch=0,
            grid=grid,
            in_specs=[
                pl.BlockSpec((rows_blk, win_w), lambda i: (i, 0)),
                pl.BlockSpec((n_win * win_w, acc_w), lambda i: (0, 0)),
                pl.BlockSpec((1, acc_w), lambda i: (0, 0)),
            ],
            out_specs=pl.BlockSpec((rows_blk, out_half), lambda i: (i, 0)),
        ),
        compiler_params=pltpu.CompilerParams(
            dimension_semantics=("parallel",),
            vmem_limit_bytes=vmem_limit),
    )(x2, w2, b2)
    # TODO(synk): tile the time axis with a +/-1 packed-row halo when batch is
    # small and B*T is very long, so the grid never collapses to a single step
    # on v7x's two TensorCores (and tiles stay inside its 64 MiB VMEM).
    return out2.reshape(batch, time_steps, c_out)


def conv_glu_reference(x, w, b, *, left_padding, right_padding):
    """Pure-JAX reference matching the PyTorch ConvGLU semantics."""
    k_sz, _, two_c_out = w.shape
    c_out = two_c_out // 2
    x_pad = jnp.pad(x, ((0, 0), (left_padding, right_padding), (0, 0)))
    t_out = x_pad.shape[1] - k_sz + 1
    acc = jnp.zeros((x.shape[0], t_out, two_c_out), jnp.float32) + b
    for k in range(k_sz):
        acc = acc + jnp.einsum(
            "bti,io->bto",
            x_pad[:, k:k + t_out, :].astype(jnp.float32),
            w[k].astype(jnp.float32))
    return acc[..., :c_out] * jax.nn.sigmoid(acc[..., c_out:])


if __name__ == "__main__":
    # Module config (small, consistent with the forward pass).
    input_size = 32     # H, hidden size of the input
    output_size = 32    # O
    kernel_size = 3     # K
    encode = True
    left_padding = (kernel_size - 1) // 2 if encode else kernel_size - 1
    right_padding = kernel_size // 2 if encode else 0

    batch = 2
    time_step = 16

    key = jax.random.PRNGKey(0)
    kx, kw, kb = jax.random.split(key, 3)

    # PyTorch Conv1d weight is (2*O, C_in, K); kept here as (K, C_in, 2*O)
    # with the GLU value half in output channels [:O] and the gate half in
    # [O:], which is the layout the wrapper packs for the kernel.
    fan_in = input_size * kernel_size
    bound = 1.0 / (fan_in ** 0.5)
    w = jax.random.uniform(kw, (kernel_size, input_size, 2 * output_size),
                           minval=-bound, maxval=bound, dtype=jnp.float32)
    b = jax.random.uniform(kb, (2 * output_size,),
                           minval=-bound, maxval=bound, dtype=jnp.float32)
    x = jax.random.normal(kx, (batch, time_step, input_size), dtype=jnp.float32)

    ref = conv_glu_reference(x, w, b, left_padding=left_padding,
                             right_padding=right_padding)

    # f32 operand path.
    out = conv_glu(x, w, b, kernel_size=kernel_size,
                   left_padding=left_padding, right_padding=right_padding)
    out = jax.block_until_ready(out)
    assert out.shape == (batch, time_step, output_size), out.shape
    assert jnp.allclose(out, ref, atol=1e-4, rtol=1e-4), "f32 mismatch vs reference"

    # bf16 MXU-operand path (cast happens inside the kernel): f32 accumulation
    # and f32 GLU epilogue; looser tolerance is the intended precision trade.
    out_bf16 = conv_glu(x, w, b, kernel_size=kernel_size,
                        left_padding=left_padding, right_padding=right_padding,
                        compute_dtype=jnp.bfloat16)
    out_bf16 = jax.block_until_ready(out_bf16)
    assert out_bf16.shape == (batch, time_step, output_size), out_bf16.shape
    assert jnp.allclose(out_bf16, ref, atol=1e-1, rtol=1e-1), "bf16 mismatch vs reference"

    print("KERNEL_OK")
</pallas_src>

<mosaic_0001>
module attributes {stable_mosaic.version = 11 : i64} {
  func.func @_conv_glu_kernel(%arg0: i32, %arg1: memref<8x128xf32, #tpu.memory_space<vmem>>, %arg2: memref<384x256xf32, #tpu.memory_space<vmem>>, %arg3: memref<1x256xf32, #tpu.memory_space<vmem>>, %arg4: memref<8x128xf32, #tpu.memory_space<vmem>>) attributes {dimension_semantics = [#tpu.dimension_semantics<parallel>], iteration_bounds = array<i64: 1>, scalar_prefetch = 0 : i64, scratch_operands = 0 : i64, tpu.core_type = #tpu.core_type<tc>, window_params = [{transform_indices = @transform_0, window_bounds = array<i64: 8, 128>}, {pipeline_mode = #tpu.pipeline_mode<synchronous>, transform_indices = @transform_1, window_bounds = array<i64: 384, 256>}, {pipeline_mode = #tpu.pipeline_mode<synchronous>, transform_indices = @transform_2, window_bounds = array<i64: 1, 256>}, {transform_indices = @transform_3, window_bounds = array<i64: 8, 128>}]} {
    %c0 = arith.constant 0 : index
    %c0_0 = arith.constant 0 : index
    %0 = vector.load %arg1[%c0, %c0_0] : memref<8x128xf32, #tpu.memory_space<vmem>>, vector<8x128xf32>
    %1 = tpu.iota {dimensions = array<i32: 0>} : vector<8x1xi32>
    %c4_i32 = arith.constant 4 : i32
    %c0_i32 = arith.constant 0 : i32
    %2 = arith.cmpi eq, %c4_i32, %c0_i32 : i32
    %c1_i32 = arith.constant 1 : i32
    %3 = arith.select %2, %c1_i32, %c4_i32 : i32
    %4 = vector.broadcast %3 : i32 to vector<8x1xi32>
    %5 = arith.remsi %1, %4 : vector<8x1xi32>
    %c0_i32_1 = arith.constant 0 : i32
    %6 = vector.broadcast %c0_i32_1 : i32 to vector<8x1xi32>
    %7 = arith.cmpi ne, %5, %6 : vector<8x1xi32>
    %c0_i32_2 = arith.constant 0 : i32
    %8 = vector.broadcast %c0_i32_2 : i32 to vector<8x1xi32>
    %9 = arith.cmpi slt, %5, %8 : vector<8x1xi32>
    %c0_i32_3 = arith.constant 0 : i32
    %10 = arith.cmpi slt, %3, %c0_i32_3 : i32
    %11 = vector.broadcast %10 : i1 to vector<8x1xi1>
    %12 = vector.broadcast %11 : vector<8x1xi1> to vector<8x1xi1>
    %13 = arith.xori %9, %12 : vector<8x1xi1>
    %14 = arith.andi %13, %7 : vector<8x1xi1>
    %15 = vector.broadcast %3 : i32 to vector<8x1xi32>
    %16 = arith.addi %5, %15 : vector<8x1xi32>
    %17 = arith.select %14, %16, %5 : vector<8x1xi1>, vector<8x1xi32>
    %c1_i32_4 = arith.constant 1 : i32
    %18 = tpu.dynamic_rotate %0 by %c1_i32_4 dim 0 : vector<8x128xf32>, i32 -> vector<8x128xf32>
    %c-1_i32 = arith.constant -1 : i32
    %19 = vector.broadcast %c-1_i32 : i32 to vector<8x1xi32>
    %20 = arith.addi %17, %19 : vector<8x1xi32>
    %c0_i32_5 = arith.constant 0 : i32
    %21 = vector.broadcast %c0_i32_5 : i32 to vector<8x1xi32>
    %22 = arith.cmpi sge, %20, %21 : vector<8x1xi32>
    %c-1_i32_6 = arith.constant -1 : i32
    %23 = vector.broadcast %c-1_i32_6 : i32 to vector<8x1xi32>
    %24 = arith.addi %17, %23 : vector<8x1xi32>
    %c4_i32_7 = arith.constant 4 : i32
    %25 = vector.broadcast %c4_i32_7 : i32 to vector<8x1xi32>
    %26 = arith.cmpi slt, %24, %25 : vector<8x1xi32>
    %27 = arith.andi %22, %26 : vector<8x1xi1>
    %cst = arith.constant 0.000000e+00 : f32
    %28 = vector.broadcast %cst : f32 to vector<8x128xf32>
    %29 = vector.shape_cast %27 : vector<8x1xi1> to vector<8x1xi1>
    %30 = vector.broadcast %29 : vector<8x1xi1> to vector<8x128xi1>
    %31 = arith.select %30, %18, %28 : vector<8x128xi1>, vector<8x128xf32>
    %c7_i32 = arith.constant 7 : i32
    %32 = tpu.dynamic_rotate %0 by %c7_i32 dim 0 : vector<8x128xf32>, i32 -> vector<8x128xf32>
    %c1_i32_8 = arith.constant 1 : i32
    %33 = vector.broadcast %c1_i32_8 : i32 to vector<8x1xi32>
    %34 = arith.addi %17, %33 : vector<8x1xi32>
    %c0_i32_9 = arith.constant 0 : i32
    %35 = vector.broadcast %c0_i32_9 : i32 to vector<8x1xi32>
    %36 = arith.cmpi sge, %34, %35 : vector<8x1xi32>
    %c1_i32_10 = arith.constant 1 : i32
    %37 = vector.broadcast %c1_i32_10 : i32 to vector<8x1xi32>
    %38 = arith.addi %17, %37 : vector<8x1xi32>
    %c4_i32_11 = arith.constant 4 : i32
    %39 = vector.broadcast %c4_i32_11 : i32 to vector<8x1xi32>
    %40 = arith.cmpi slt, %38, %39 : vector<8x1xi32>
    %41 = arith.andi %36, %40 : vector<8x1xi1>
    %cst_12 = arith.constant 0.000000e+00 : f32
    %42 = vector.broadcast %cst_12 : f32 to vector<8x128xf32>
    %43 = vector.shape_cast %41 : vector<8x1xi1> to vector<8x1xi1>
    %44 = vector.broadcast %43 : vector<8x1xi1> to vector<8x128xi1>
    %45 = arith.select %44, %32, %42 : vector<8x128xi1>, vector<8x128xf32>
    %46 = tpu.concatenate %31, %0, %45 in 1 : vector<8x128xf32>, vector<8x128xf32>, vector<8x128xf32> -> vector<8x384xf32>
    %c0_13 = arith.constant 0 : index
    %c0_14 = arith.constant 0 : index
    %47 = vector.load %arg2[%c0_13, %c0_14] : memref<384x256xf32, #tpu.memory_space<vmem>>, vector<384x256xf32>
    %cst_15 = arith.constant dense<0.000000e+00> : vector<8x256xf32>
    %48 = tpu.matmul %46, %47, %cst_15 {dimension_numbers = #tpu.dot_dimension_numbers<[1], [0], [0], [1], [0, 0, 1, 1], [], []>} : vector<8x384xf32>, vector<384x256xf32>, vector<8x256xf32> -> vector<8x256xf32>
    %c0_16 = arith.constant 0 : index
    %c0_17 = arith.constant 0 : index
    %49 = vector.load %arg3[%c0_16, %c0_17] : memref<1x256xf32, #tpu.memory_space<vmem>>, vector<1x256xf32>
    %50 = vector.broadcast %49 : vector<1x256xf32> to vector<8x256xf32>
    %51 = arith.addf %48, %50 : vector<8x256xf32>
    %52 = vector.extract_strided_slice %51 {offsets = [0, 0], sizes = [8, 128], strides = [1, 1]} : vector<8x256xf32> to vector<8x128xf32>
    %53 = vector.extract_strided_slice %51 {offsets = [0, 128], sizes = [8, 128], strides = [1, 1]} : vector<8x256xf32> to vector<8x128xf32>
    %54 = arith.negf %53 : vector<8x128xf32>
    %55 = math.exp %54 : vector<8x128xf32>
    %cst_18 = arith.constant 1.000000e+00 : f32
    %56 = vector.broadcast %cst_18 : f32 to vector<8x128xf32>
    %57 = arith.addf %56, %55 : vector<8x128xf32>
    %58 = arith.divf %56, %57 : vector<8x128xf32>
    %59 = arith.mulf %52, %58 : vector<8x128xf32>
    %c0_19 = arith.constant 0 : index
    %c0_20 = arith.constant 0 : index
    %60 = vector.load %arg4[%c0_19, %c0_20] : memref<8x128xf32, #tpu.memory_space<vmem>>, vector<8x128xf32>
    tpu.vector_store %arg4[%c0_19, %c0_20], %59 {strides = array<i32>} : memref<8x128xf32, #tpu.memory_space<vmem>>, vector<8x128xf32>,
    return
  }
  func.func @transform_0(%arg0: i32) -> (i32, i32) {
    %c0_i32 = arith.constant 0 : i32
    %c0_i32_0 = arith.constant 0 : i32
    return %arg0, %c0_i32 : i32, i32
  }
  func.func @transform_1(%arg0: i32) -> (i32, i32) {
    %c0_i32 = arith.constant 0 : i32
    %c0_i32_0 = arith.constant 0 : i32
    %c0_i32_1 = arith.constant 0 : i32
    return %c0_i32, %c0_i32_0 : i32, i32
  }
  func.func @transform_2(%arg0: i32) -> (i32, i32) {
    %c0_i32 = arith.constant 0 : i32
    %c0_i32_0 = arith.constant 0 : i32
    %c0_i32_1 = arith.constant 0 : i32
    return %c0_i32, %c0_i32_0 : i32, i32
  }
  func.func @transform_3(%arg0: i32) -> (i32, i32) {
    %c0_i32 = arith.constant 0 : i32
    %c0_i32_0 = arith.constant 0 : i32
    return %arg0, %c0_i32 : i32, i32
  }
}

</mosaic_0001>

<llo_original>
// kernel: tpu_custom_call.1
$region0: #{tpu_custom_call.1}
  #allocation0 [shape = 'u32[]', space=smem, size = 0x4, offset = 0x4, fixed_abs, tag = 'smem constant byte address 0x4 - core index']
  #allocation1 [shape = 'u32[144,128]{1,0:T(1,128)}', space=vmem, size = 0x12000, scoped, tag = 'internal scratch']
  %s0 = inlined_call_operand.hbm [shape: f32[8,128], index: 0, kind: input, shape index: {}]
  %s1 = inlined_call_operand.hbm [shape: f32[384,256], index: 1, kind: input, shape index: {}]
  %s2 = inlined_call_operand.vmem [shape: f32[1,256], index: 2, kind: input, shape index: {}]
  %s3 = inlined_call_operand.hbm [shape: f32[8,128], index: 3, kind: output, shape index: {}]
  %s4 = sld [smem:[#allocation0]]
  $region30: #{tpu_custom_call.1} parent=0
    _
  %s6 = ssub.s32 1, %s4
  %s7 = scalar_select 0, %s6, %s4
  $region1: #{tpu_custom_call.1} parent=0
    #allocation2 [shape = 'u8[4096]{0}', space=vmem, size = 0x1000, scoped, tag = 'input window, operand 0, single buffered']
    #allocation3 [shape = 's32[1]{0}', space=sflag, size = 0x4, scoped, tag = 'scoped memory for tpu_custom_call.1']
    #allocation4 [shape = 's32[1]{0}', space=sflag, size = 0x4, scoped, tag = 'scoped memory for tpu_custom_call.1']
    #allocation5 [shape = 'u8[393216]{0}', space=vmem, size = 0x60000, scoped, tag = 'input window, operand 1, single buffered']
    #allocation6 [shape = 's32[1]{0}', space=sflag, size = 0x4, scoped, tag = 'scoped memory for tpu_custom_call.1']
    #allocation7 [shape = 'u8[4096]{0}', space=vmem, size = 0x1000, scoped, tag = 'output window, operand 0, single buffered']
    %8 = vsyncpa [#allocation3], 0
    %9 = vsyncpa [#allocation6], 0
    %10 = vsyncpa [#allocation4], 0
    // Predicated region
    $region2: #{tpu_custom_call.1} parent=1 // pred_check
      _
    $region3: #{tpu_custom_call.1} parent=1 // pred_check_branch
      %12 = sbr.rel (0) target = $region5
    $region4: #{tpu_custom_call.1} parent=1 // pred_region
      %s14 = ssub.s32 128, 128
      %15 = vsyncadd [#allocation3], %s14
      %s17 = sshll.u32 [#allocation2], 4
      %s18 = int_to_ptr.vmem [resolvable:$true] %s17
      %20 = dma.hbm_to_vmem [thread:$0]  %s0, 128, %s18, [#allocation3]
    $region5: #{tpu_custom_call.1} parent=1 // pred_fallthru
      _
    // Predicated region
    $region6: #{tpu_custom_call.1} parent=1 // pred_check
      _
    $region7: #{tpu_custom_call.1} parent=1 // pred_check_branch
      %22 = sbr.rel (0) target = $region9
    $region8: #{tpu_custom_call.1} parent=1 // pred_region
      %s24 = ssub.s32 12288, 12288
      %25 = vsyncadd [#allocation6], %s24
      %s26 = sshll.u32 [#allocation5], 4
      %s27 = int_to_ptr.vmem [resolvable:$true] %s26
      %32 = dma.hbm_to_vmem [thread:$0]  %s1, 12288, %s27, [#allocation6], 256, 256, 16
    $region9: #{tpu_custom_call.1} parent=1 // pred_fallthru
      _
    // Predicated region
    $region10: #{tpu_custom_call.1} parent=1 // pred_check
      _
    $region11: #{tpu_custom_call.1} parent=1 // pred_check_branch
      %34 = sbr.rel (0) target = $region13
    $region12: #{tpu_custom_call.1} parent=1 // pred_region
      _
    $region13: #{tpu_custom_call.1} parent=1 // pred_fallthru
      _
    // Predicated region
    $region14: #{tpu_custom_call.1} parent=1 // pred_check
      _
    $region15: #{tpu_custom_call.1} parent=1 // pred_check_branch
      %36 = sbr.rel (0) target = $region17
    $region16: #{tpu_custom_call.1} parent=1 // pred_region
      %37 = dma.done [#allocation3], 128
    $region17: #{tpu_custom_call.1} parent=1 // pred_fallthru
      _
    // Predicated region
    $region18: #{tpu_custom_call.1} parent=1 // pred_check
      _
    $region19: #{tpu_custom_call.1} parent=1 // pred_check_branch
      %39 = sbr.rel (0) target = $region21
    $region20: #{tpu_custom_call.1} parent=1 // pred_region
      %40 = dma.done [#allocation6], 12288
    $region21: #{tpu_custom_call.1} parent=1 // pred_fallthru
      _
    %v41 = vld [vmem:[#allocation2] sm:$0xff]
    %v42 = vlaneseq
    %v43 = vshrl.u32 %v42, 7
    %vm44 = vcmp.lt.s32.totalorder %v43, 0
    %v45 = vsub.s32 0, %v43
    %v46 = vsel %vm44, %v45, %v43
    %v47 = vshrl.u32 %v46, 2
    %v48 = vand.u32 %v46, 3
    %v49 = vsub.s32 0, %v48
    %v50 = vsel %vm44, %v49, %v48
    %vm51 = vcmp.ne.s32.totalorder %v50, 0
    %vm52 = vcmp.lt.s32.totalorder %v50, 0
    %vm53 = vmand %vm52, %vm51
    %v54 = vadd.s32 %v50, 4
    %v55 = vsel %vm53, %v54, %v50
    %v56 = vrot.slane %v41, 7
    %v57 = vadd.s32 %v55, 4294967295
    %vm58 = vcmp.ge.s32.totalorder %v57, 0
    %vm59 = vcmp.lt.s32.totalorder %v57, 4
    %vm60 = vmand %vm58, %vm59
    %v61 = vsel %vm60, 1, 0
    %vm62 = vcmp.eq.s32.totalorder %v61, 1
    %v63 = vsel %vm62, %v56, 0.0
    %v64 = vrot.slane %v41, 1
    %v65 = vadd.s32 %v55, 1
    %vm66 = vcmp.ge.s32.totalorder %v65, 0
    %vm67 = vcmp.lt.s32.totalorder %v65, 4
    %vm68 = vmand %vm66, %vm67
    %v69 = vsel %vm68, 1, 0
    %vm70 = vcmp.eq.s32.totalorder %v69, 1
    %v71 = vsel %vm70, %v64, 0.0
    %v72 = vld [vmem:[#allocation5] sm:$0xff]
    %v73 = vld [vmem:[#allocation5 + $0x8] sm:$0xff]
    %v74 = vld [vmem:[#allocation5 + $0x10] sm:$0xff]
    %v75 = vld [vmem:[#allocation5 + $0x18] sm:$0xff]
    %v76 = vld [vmem:[#allocation5 + $0x20] sm:$0xff]
    %v77 = vld [vmem:[#allocation5 + $0x28] sm:$0xff]
    %v78 = vld [vmem:[#allocation5 + $0x30] sm:$0xff]
    %v79 = vld [vmem:[#allocation5 + $0x38] sm:$0xff]
    %v80 = vld [vmem:[#allocation5 + $0x40] sm:$0xff]
    %v81 = vld [vmem:[#allocation5 + $0x48] sm:$0xff]
    %v82 = vld [vmem:[#allocation5 + $0x50] sm:$0xff]
    %v83 = vld [vmem:[#allocation5 + $0x58] sm:$0xff]
    %v84 = vld [vmem:[#allocation5 + $0x60] sm:$0xff]
    %v85 = vld [vmem:[#allocation5 + $0x68] sm:$0xff]
    %v86 = vld [vmem:[#allocation5 + $0x70] sm:$0xff]
    %v87 = vld [vmem:[#allocation5 + $0x78] sm:$0xff]
    %v88 = vld [vmem:[#allocation5 + $0x80] sm:$0xff]
    %v89 = vld [vmem:[#allocation5 + $0x88] sm:$0xff]
    %v90 = vld [vmem:[#allocation5 + $0x90] sm:$0xff]
    %v91 = vld [vmem:[#allocation5 + $0x98] sm:$0xff]
    %v92 = vld [vmem:[#allocation5 + $0xa0] sm:$0xff]
    %v93 = vld [vmem:[#allocation5 + $0xa8] sm:$0xff]
    %v94 = vld [vmem:[#allocation5 + $0xb0] sm:$0xff]
    %v95 = vld [vmem:[#allocation5 + $0xb8] sm:$0xff]
    %v96 = vld [vmem:[#allocation5 + $0xc0] sm:$0xff]
    %v97 = vld [vmem:[#allocation5 + $0xc8] sm:$0xff]
    %v98 = vld [vmem:[#allocation5 + $0xd0] sm:$0xff]
    %v99 = vld [vmem:[#allocation5 + $0xd8] sm:$0xff]
    %v100 = vld [vmem:[#allocation5 + $0xe0] sm:$0xff]
    %v101 = vld [vmem:[#allocation5 + $0xe8] sm:$0xff]
    %v102 = vld [vmem:[#allocation5 + $0xf0] sm:$0xff]
    %v103 = vld [vmem:[#allocation5 + $0xf8] sm:$0xff]
    %v104 = vld [vmem:[#allocation5 + $0x100] sm:$0xff]
    %v105 = vld [vmem:[#allocation5 + $0x108] sm:$0xff]
    %v106 = vld [vmem:[#allocation5 + $0x110] sm:$0xff]
    %v107 = vld [vmem:[#allocation5 + $0x118] sm:$0xff]
    %v108 = vld [vmem:[#allocation5 + $0x120] sm:$0xff]
    %v109 = vld [vmem:[#allocation5 + $0x128] sm:$0xff]
    %v110 = vld [vmem:[#allocation5 + $0x130] sm:$0xff]
    %v111 = vld [vmem:[#allocation5 + $0x138] sm:$0xff]
    %v112 = vld [vmem:[#allocation5 + $0x140] sm:$0xff]
    %v113 = vld [vmem:[#allocation5 + $0x148] sm:$0xff]
    %v114 = vld [vmem:[#allocation5 + $0x150] sm:$0xff]
    %v115 = vld [vmem:[#allocation5 + $0x158] sm:$0xff]
    %v116 = vld [vmem:[#allocation5 + $0x160] sm:$0xff]
    %v117 = vld [vmem:[#allocation5 + $0x168] sm:$0xff]
    %v118 = vld [vmem:[#allocation5 + $0x170] sm:$0xff]
    %v119 = vld [vmem:[#allocation5 + $0x178] sm:$0xff]
    %v120 = vld [vmem:[#allocation5 + $0x180] sm:$0xff]
    %v121 = vld [vmem:[#allocation5 + $0x188] sm:$0xff]
    %v122 = vld [vmem:[#allocation5 + $0x190] sm:$0xff]
    %v123 = vld [vmem:[#allocation5 + $0x198] sm:$0xff]
    %v124 = vld [vmem:[#allocation5 + $0x1a0] sm:$0xff]
    %v125 = vld [vmem:[#allocation5 + $0x1a8] sm:$0xff]
    %v126 = vld [vmem:[#allocation5 + $0x1b0] sm:$0xff]
    %v127 = vld [vmem:[#allocation5 + $0x1b8] sm:$0xff]
    %v128 = vld [vmem:[#allocation5 + $0x1c0] sm:$0xff]
    %v129 = vld [vmem:[#allocation5 + $0x1c8] sm:$0xff]
    %v130 = vld [vmem:[#allocation5 + $0x1d0] sm:$0xff]
    %v131 = vld [vmem:[#allocation5 + $0x1d8] sm:$0xff]
    %v132 = vld [vmem:[#allocation5 + $0x1e0] sm:$0xff]
    %v133 = vld [vmem:[#allocation5 + $0x1e8] sm:$0xff]
    %v134 = vld [vmem:[#allocation5 + $0x1f0] sm:$0xff]
    %v135 = vld [vmem:[#allocation5 + $0x1f8] sm:$0xff]
    %v136 = vld [vmem:[#allocation5 + $0x200] sm:$0xff]
    %v137 = vld [vmem:[#allocation5 + $0x208] sm:$0xff]
    %v138 = vld [vmem:[#allocation5 + $0x210] sm:$0xff]
    %v139 = vld [vmem:[#allocation5 + $0x218] sm:$0xff]
    %v140 = vld [vmem:[#allocation5 + $0x220] sm:$0xff]
    %v141 = vld [vmem:[#allocation5 + $0x228] sm:$0xff]
    %v142 = vld [vmem:[#allocation5 + $0x230] sm:$0xff]
    %v143 = vld [vmem:[#allocation5 + $0x238] sm:$0xff]
    %v144 = vld [vmem:[#allocation5 + $0x240] sm:$0xff]
    %v145 = vld [vmem:[#allocation5 + $0x248] sm:$0xff]
    %v146 = vld [vmem:[#allocation5 + $0x250] sm:$0xff]
    %v147 = vld [vmem:[#allocation5 + $0x258] sm:$0xff]
    %v148 = vld [vmem:[#allocation5 + $0x260] sm:$0xff]
    %v149 = vld [vmem:[#allocation5 + $0x268] sm:$0xff]
    %v150 = vld [vmem:[#allocation5 + $0x270] sm:$0xff]
    %v151 = vld [vmem:[#allocation5 + $0x278] sm:$0xff]
    %v152 = vld [vmem:[#allocation5 + $0x280] sm:$0xff]
    %v153 = vld [vmem:[#allocation5 + $0x288] sm:$0xff]
    %v154 = vld [vmem:[#allocation5 + $0x290] sm:$0xff]
    %v155 = vld [vmem:[#allocation5 + $0x298] sm:$0xff]
    %v156 = vld [vmem:[#allocation5 + $0x2a0] sm:$0xff]
    %v157 = vld [vmem:[#allocation5 + $0x2a8] sm:$0xff]
    %v158 = vld [vmem:[#allocation5 + $0x2b0] sm:$0xff]
    %v159 = vld [vmem:[#allocation5 + $0x2b8] sm:$0xff]
    %v160 = vld [vmem:[#allocation5 + $0x2c0] sm:$0xff]
    %v161 = vld [vmem:[#allocation5 + $0x2c8] sm:$0xff]
    %v162 = vld [vmem:[#allocation5 + $0x2d0] sm:$0xff]
    %v163 = vld [vmem:[#allocation5 + $0x2d8] sm:$0xff]
    %v164 = vld [vmem:[#allocation5 + $0x2e0] sm:$0xff]
    %v165 = vld [vmem:[#allocation5 + $0x2e8] sm:$0xff]
    %v166 = vld [vmem:[#allocation5 + $0x2f0] sm:$0xff]
    %v167 = vld [vmem:[#allocation5 + $0x2f8] sm:$0xff]
    %v168 = vld [vmem:[%s2] sm:$0x3]
    %v170 = vlaneseq
    %v171 = vshrl.u32 %v170, 7
    %v172 = vsub.s32 0, %v171
    %v173 = vrot.slane %v168, %v172
    %v174 = vlaneseq
    %v175 = vshrl.u32 %v174, 7
    %v176 = vsub.s32 1, %v175
    %v177 = vrot.slane %v168, %v176
    %180 = vmatprep.subr.mxu0 %v103
    %181 = vmatpush1.msra.mxu0 %v102
    %182 = vmatprep.subr.mxu0 %v101
    %183 = vmatpush1.msra.mxu0 %v100
    %184 = vmatprep.subr.mxu0 %v99
    %185 = vmatpush1.msra.mxu0 %v98
    %186 = vmatprep.subr.mxu0 %v97
    %187 = vmatpush1.msra.mxu0 %v96
    %188 = vmatprep.subr.mxu0 %v95
    %189 = vmatpush1.msra.mxu0 %v94
    %190 = vmatprep.subr.mxu0 %v93
    %191 = vmatpush1.msra.mxu0 %v92
    %192 = vmatprep.subr.mxu0 %v91
    %193 = vmatpush1.msra.mxu0 %v90
    %194 = vmatprep.subr.mxu0 %v89
    %195 = vmatpush1.msra.mxu0 %v88
    %196 = vmatprep.subr.mxu0 %v87
    %197 = vmatpush1.msra.mxu0 %v86
    %198 = vmatprep.subr.mxu0 %v85
    %199 = vmatpush1.msra.mxu0 %v84
    %200 = vmatprep.subr.mxu0 %v83
    %201 = vmatpush1.msra.mxu0 %v82
    %202 = vmatprep.subr.mxu0 %v81
    %203 = vmatpush1.msra.mxu0 %v80
    %204 = vmatprep.subr.mxu0 %v79
    %205 = vmatpush1.msra.mxu0 %v78
    %206 = vmatprep.subr.mxu0 %v77
    %207 = vmatpush1.msra.mxu0 %v76
    %208 = vmatprep.subr.mxu0 %v75
    %209 = vmatpush1.msra.mxu0 %v74
    %210 = vmatprep.subr.mxu0 %v73
    %211 = vmatpush1.msra.mxu0 %v72
    %212 = vmatprep.subr.mxu0 %v135
    %213 = vmatpush2.msra.mxu0 %v134
    %214 = vmatprep.subr.mxu0 %v133
    %215 = vmatpush2.msra.mxu0 %v132
    %216 = vmatprep.subr.mxu0 %v131
    %217 = vmatpush2.msra.mxu0 %v130
    %218 = vmatprep.subr.mxu0 %v129
    %219 = vmatpush2.msra.mxu0 %v128
    %220 = vmatprep.subr.mxu0 %v127
    %221 = vmatpush2.msra.mxu0 %v126
    %222 = vmatprep.subr.mxu0 %v125
    %223 = vmatpush2.msra.mxu0 %v124
    %224 = vmatprep.subr.mxu0 %v123
    %225 = vmatpush2.msra.mxu0 %v122
    %226 = vmatprep.subr.mxu0 %v121
    %227 = vmatpush2.msra.mxu0 %v120
    %228 = vmatprep.subr.mxu0 %v119
    %229 = vmatpush2.msra.mxu0 %v118
    %230 = vmatprep.subr.mxu0 %v117
    %231 = vmatpush2.msra.mxu0 %v116
    %232 = vmatprep.subr.mxu0 %v115
    %233 = vmatpush2.msra.mxu0 %v114
    %234 = vmatprep.subr.mxu0 %v113
    %235 = vmatpush2.msra.mxu0 %v112
    %236 = vmatprep.subr.mxu0 %v111
    %237 = vmatpush2.msra.mxu0 %v110
    %238 = vmatprep.subr.mxu0 %v109
    %239 = vmatpush2.msra.mxu0 %v108
    %240 = vmatprep.subr.mxu0 %v107
    %241 = vmatpush2.msra.mxu0 %v106
    %242 = vmatprep.subr.mxu0 %v105
    %243 = vmatpush2.msra.mxu0 %v104
    %244 = vmatprep.mubr.f32.mxu0 %v41
    %245 = vmatmul.mubr.f32.gmra.mxu0 %v63
    %v246 = vpop.f32.mrf.mxu0
    %v247 = vadd.f32 %v173, %v246
    %v248 = vpop.f32.mrf.mxu0
    %v249 = vadd.f32 %v177, %v248
    %250 = vdwg.mxu0
    %251 = vmatprep.subr.mxu0 %v167
    %252 = vmatpush1.msra.mxu0 %v166
    %253 = vmatprep.subr.mxu0 %v165
    %254 = vmatpush1.msra.mxu0 %v164
    %255 = vmatprep.subr.mxu0 %v163
    %256 = vmatpush1.msra.mxu0 %v162
    %257 = vmatprep.subr.mxu0 %v161
    %258 = vmatpush1.msra.mxu0 %v160
    %259 = vmatprep.subr.mxu0 %v159
    %260 = vmatpush1.msra.mxu0 %v158
    %261 = vmatprep.subr.mxu0 %v157
    %262 = vmatpush1.msra.mxu0 %v156
    %263 = vmatprep.subr.mxu0 %v155
    %264 = vmatpush1.msra.mxu0 %v154
    %265 = vmatprep.subr.mxu0 %v153
    %266 = vmatpush1.msra.mxu0 %v152
    %267 = vmatprep.subr.mxu0 %v151
    %268 = vmatpush1.msra.mxu0 %v150
    %269 = vmatprep.subr.mxu0 %v149
    %270 = vmatpush1.msra.mxu0 %v148
    %271 = vmatprep.subr.mxu0 %v147
    %272 = vmatpush1.msra.mxu0 %v146
    %273 = vmatprep.subr.mxu0 %v145
    %274 = vmatpush1.msra.mxu0 %v144
    %275 = vmatprep.subr.mxu0 %v143
    %276 = vmatpush1.msra.mxu0 %v142
    %277 = vmatprep.subr.mxu0 %v141
    %278 = vmatpush1.msra.mxu0 %v140
    %279 = vmatprep.subr.mxu0 %v139
    %280 = vmatpush1.msra.mxu0 %v138
    %281 = vmatprep.subr.mxu0 %v137
    %282 = vmatpush1.msra.mxu0 %v136
    %283 = vmatprep.subr.mxu0 0.0
    %284 = vmatpush2.msra.mxu0 0.0
    %285 = vmatprep.subr.mxu0 0.0
    %286 = vmatpush2.msra.mxu0 0.0
    %287 = vmatprep.subr.mxu0 0.0
    %288 = vmatpush2.msra.mxu0 0.0
    %289 = vmatprep.subr.mxu0 0.0
    %290 = vmatpush2.msra.mxu0 0.0
    %291 = vmatprep.subr.mxu0 0.0
    %292 = vmatpush2.msra.mxu0 0.0
    %293 = vmatprep.subr.mxu0 0.0
    %294 = vmatpush2.msra.mxu0 0.0
    %295 = vmatprep.subr.mxu0 0.0
    %296 = vmatpush2.msra.mxu0 0.0
    %297 = vmatprep.subr.mxu0 0.0
    %298 = vmatpush2.msra.mxu0 0.0
    %299 = vmatprep.subr.mxu0 0.0
    %300 = vmatpush2.msra.mxu0 0.0
    %301 = vmatprep.subr.mxu0 0.0
    %302 = vmatpush2.msra.mxu0 0.0
    %303 = vmatprep.subr.mxu0 0.0
    %304 = vmatpush2.msra.mxu0 0.0
    %305 = vmatprep.subr.mxu0 0.0
    %306 = vmatpush2.msra.mxu0 0.0
    %307 = vmatprep.subr.mxu0 0.0
    %308 = vmatpush2.msra.mxu0 0.0
    %309 = vmatprep.subr.mxu0 0.0
    %310 = vmatpush2.msra.mxu0 0.0
    %311 = vmatprep.subr.mxu0 0.0
    %312 = vmatpush2.msra.mxu0 0.0
    %313 = vmatprep.subr.mxu0 0.0
    %314 = vmatpush2.msra.mxu0 0.0
    %315 = vmatprep.mubr.f32.mxu0 0.0
    %316 = vmatmul.mubr.f32.gmra.mxu0 %v71
    %v317 = vpop.f32.mrf.mxu0
    %v318 = vadd.f32 %v247, %v317
    %v319 = vpop.f32.mrf.mxu0
    %v320 = vadd.f32 %v249, %v319
    %321 = vdwg.mxu0
    %v322 = vxor.u32 %v320, 2147483648
    %v323 = vmul.f32 %v322, 1.442695
    %v324 = vpow.pop %v323
    %v325 = vadd.f32 %v324, 1.0
    %v326 = vrcp.pop %v325
    %v327 = vmul.f32 1.0, %v326
    %v328 = vmul.f32 %v318, %v327
    %329 = vst [vmem:[#allocation7] sm:$0xff] %v328
    // Predicated region
    $region22: #{tpu_custom_call.1} parent=1 // pred_check
      _
    $region23: #{tpu_custom_call.1} parent=1 // pred_check_branch
      %331 = sbr.rel (0) target = $region25
    $region24: #{tpu_custom_call.1} parent=1 // pred_region
      %s333 = ssub.s32 128, 128
      %334 = vsyncadd [#allocation4], %s333
      %s336 = sshll.u32 [#allocation7], 4
      %s337 = int_to_ptr.vmem [resolvable:$true] %s336
      %339 = dma.vmem_to_hbm [thread:$0]  %s337, 128, %s3, [#allocation4]
    $region25: #{tpu_custom_call.1} parent=1 // pred_fallthru
      _
    // Predicated region
    $region26: #{tpu_custom_call.1} parent=1 // pred_check
      _
    $region27: #{tpu_custom_call.1} parent=1 // pred_check_branch
      %341 = sbr.rel (0) target = $region29
    $region28: #{tpu_custom_call.1} parent=1 // pred_region
      %342 = dma.done [#allocation4], 128
    $region29: #{tpu_custom_call.1} parent=1 // pred_fallthru
      _
    %343 = vsyncpa [#allocation3], 1
    %344 = vsyncpa [#allocation6], 1
    %345 = vsyncpa [#allocation4], 1

</llo_original>
